<compile_context>
chip_gen: v5e
topology: v5e:2x2
jax: 0.10.0
libtpu: 0.0.40
codegen_flags: <defaults>
</compile_context>

<pallas_src>
import functools

import jax
import jax.numpy as jnp
from jax.experimental import pallas as pl
from jax.experimental.pallas import tpu as pltpu

EPS = 1e-5


def _resnet_block_kernel(
    x_ref,      # [B, D]  f32, resident
    w1_ref,     # [D, tn] bf16, streams over hidden
    p1_ref,     # [2, tn] f32, row 0 = gamma1, row 1 = beta1
    w2_ref,     # [tn, D] bf16, streams over hidden
    p2_ref,     # [2, D]  f32, row 0 = gamma2, row 1 = beta2 (resident)
    o_ref,      # [B, D]  f32 output; doubles as the layer-2 accumulator
    xb_ref,     # [B, D]  matmul-dtype scratch (x cast once)
    *, inv_n, matmul_dtype,
):
    j = pl.program_id(0)

    # Cast x to the MXU operand dtype once instead of every grid step.
    @pl.when(j == 0)
    def _():
        xb_ref[...] = x_ref[...].astype(matmul_dtype)

    # ---- Linear(dim, 2*dim), hidden tile j (bias dropped: exact no-op under
    #      the training-mode BatchNorm mean subtraction below) ----------------
    h = jnp.dot(xb_ref[...], w1_ref[...], preferred_element_type=jnp.float32)

    # ---- BatchNorm1d(2*dim), training mode, one-pass batch stats ------------
    # (per-hidden-feature stats over the batch -> tiling H is exact)
    p1 = p1_ref[...]
    mean1 = jnp.sum(h, axis=0, keepdims=True) * inv_n
    ex2_1 = jnp.sum(h * h, axis=0, keepdims=True) * inv_n
    var1 = jnp.maximum(ex2_1 - mean1 * mean1, 0.0)
    h = (h - mean1) * jax.lax.rsqrt(var1 + EPS) * p1[0:1, :] + p1[1:2, :]

    # ---- ReLU ----------------------------------------------------------------
    h = jnp.maximum(h, 0.0)

    # ---- Linear(2*dim, dim): partial contribution, accumulated into o_ref ----
    part = jnp.dot(h.astype(matmul_dtype), w2_ref[...],
                   preferred_element_type=jnp.float32)

    @pl.when(j == 0)
    def _():
        o_ref[...] = part

    @pl.when(j > 0)
    def _():
        o_ref[...] += part

    # ---- finalize at last hidden tile: BatchNorm1d(dim) + ReLU + skip --------
    @pl.when(j == pl.num_programs(0) - 1)
    def _():
        p2 = p2_ref[...]
        h2 = o_ref[...]
        mean2 = jnp.sum(h2, axis=0, keepdims=True) * inv_n
        d = h2 - mean2
        var2 = jnp.sum(d * d, axis=0, keepdims=True) * inv_n   # two-pass, runs once
        y = d * jax.lax.rsqrt(var2 + EPS) * p2[0:1, :] + p2[1:2, :]
        y = jnp.maximum(y, 0.0)
        o_ref[...] = x_ref[...] + y


def _vmem_budget_bytes():
    """Usable per-core VMEM (generation-aware) minus scheduling headroom."""
    cap = 64 * 1024 * 1024          # safe fallback: v7x has 64 MiB per TensorCore
    try:
        info = pltpu.get_tpu_info()
        cap_q = int(getattr(info, "vmem_capacity_bytes", 0) or 0)
        if cap_q > 0:
            cap = cap_q
    except Exception:
        pass
    return max(cap - 12 * 1024 * 1024, 16 * 1024 * 1024)


def _estimate_vmem_bytes(B, D, tn, w_item):
    """Rough per-kernel VMEM residency for tile width tn."""
    weights = 2 * 2 * D * tn * w_item        # double-buffered w1 + w2 tiles
    resident = 2 * 2 * B * D * 4             # x + out blocks (pipeline double-buffers)
    xb = B * D * w_item                      # cast-once x scratch
    params = 2 * 8 * tn * 4 + 2 * 8 * D * 4  # (2,tn)/(2,D) pad to 8 sublanes, 2-buffered
    return weights + resident + xb + params


def _choose_hidden_tile(H, D, B, w_item, budget):
    """Largest multiple-of-128 divisor of H whose residency fits the budget.

    Prefers tn >= 512 so the strided w1 column-block DMA moves >= ~1 KiB/row.
    """
    if H % 128 != 0 or _estimate_vmem_bytes(B, D, H, w_item) <= budget:
        return H
    cands = [t for t in range(H - 128, 127, -128) if H % t == 0]
    for t in cands:
        if t >= 512 and _estimate_vmem_bytes(B, D, t, w_item) <= budget:
            return t
    for t in cands:
        if _estimate_vmem_bytes(B, D, t, w_item) <= budget:
            return t
    return cands[-1] if cands else H


def resnet_block(x, params, *, matmul_dtype=jnp.bfloat16, hidden_tile=None):
    """x: [B, dim] float32.  params: dict of f32 weights (see init_params)."""
    B, D = x.shape
    H = params["w1"].shape[1]           # = 2 * dim
    w_item = jnp.dtype(matmul_dtype).itemsize

    budget = _vmem_budget_bytes()
    tn = hidden_tile if hidden_tile is not None else _choose_hidden_tile(
        H, D, B, w_item, budget)
    assert H % tn == 0 and (tn == H or tn % 128 == 0)
    n_tiles = H // tn

    # MXU operands in bf16 (halves streamed weight bytes vs f32).
    w1 = params["w1"].astype(matmul_dtype)
    w2 = params["w2"].astype(matmul_dtype)
    # Pack BN affine params: one DMA per layer instead of three tiny ones.
    p1 = jnp.concatenate([params["g1"], params["beta1"]], axis=0)   # [2, H]
    p2 = jnp.concatenate([params["g2"], params["beta2"]], axis=0)   # [2, D]
    # Linear biases b1/b2 are intentionally NOT passed: training-mode BN removes
    # a constant per-feature shift exactly (verified against the reference).

    kernel = functools.partial(
        _resnet_block_kernel, inv_n=1.0 / B, matmul_dtype=matmul_dtype)

    grid_spec = pltpu.PrefetchScalarGridSpec(
        num_scalar_prefetch=0,
        grid=(n_tiles,),
        in_specs=[
            pl.BlockSpec((B, D), lambda j: (0, 0)),    # x      (resident)
            pl.BlockSpec((D, tn), lambda j: (0, j)),   # w1     (streams over hidden)
            pl.BlockSpec((2, tn), lambda j: (0, j)),   # gamma1/beta1 (packed)
            pl.BlockSpec((tn, D), lambda j: (j, 0)),   # w2     (streams over hidden)
            pl.BlockSpec((2, D), lambda j: (0, 0)),    # gamma2/beta2 (resident)
        ],
        # Output block index is constant across the grid -> resident; it is also
        # the layer-2 accumulator (no separate VMEM f32 scratch).
        out_specs=pl.BlockSpec((B, D), lambda j: (0, 0)),
        scratch_shapes=[pltpu.VMEM((B, D), matmul_dtype)],   # x cast once
    )

    est = _estimate_vmem_bytes(B, D, tn, w_item)
    ck = dict(dimension_semantics=("arbitrary",))   # reduction into resident output
    if est > 16 * 1024 * 1024:                      # above smallest scoped default (v5e)
        ck["vmem_limit_bytes"] = min(int(est * 3 // 2), budget)

    return pl.pallas_call(
        kernel,
        out_shape=jax.ShapeDtypeStruct((B, D), jnp.float32),
        grid_spec=grid_spec,
        compiler_params=pltpu.CompilerParams(**ck),
    )(x, w1, p1, w2, p2)


def init_params(key, dim):
    """Deterministic synthetic parameter init (matches the module's shapes)."""
    k1, k2, k3, k4 = jax.random.split(key, 4)
    hidden = 2 * dim
    w1 = jax.random.normal(k1, (dim, hidden), jnp.float32) * (1.0 / jnp.sqrt(dim))
    b1 = jax.random.normal(k2, (1, hidden), jnp.float32) * 0.1
    w2 = jax.random.normal(k3, (hidden, dim), jnp.float32) * (1.0 / jnp.sqrt(hidden))
    b2 = jax.random.normal(k4, (1, dim), jnp.float32) * 0.1
    # BatchNorm affine params: torch default init gamma=1, beta=0.
    g1 = jnp.ones((1, hidden), jnp.float32)
    beta1 = jnp.zeros((1, hidden), jnp.float32)
    g2 = jnp.ones((1, dim), jnp.float32)
    beta2 = jnp.zeros((1, dim), jnp.float32)
    return dict(w1=w1, b1=b1, g1=g1, beta1=beta1,
                w2=w2, b2=b2, g2=g2, beta2=beta2)


def resnet_block_ref(x, p, *, matmul_dtype=jnp.float32):
    """Pure-JAX reference.  Keeps the Linear biases so the test also validates
    that dropping them in the kernel is an exact no-op under training-mode BN."""
    w1 = p["w1"].astype(matmul_dtype)
    w2 = p["w2"].astype(matmul_dtype)
    h = jnp.dot(x.astype(matmul_dtype), w1,
                preferred_element_type=jnp.float32) + p["b1"]
    m = h.mean(0, keepdims=True)
    v = ((h - m) ** 2).mean(0, keepdims=True)
    h = (h - m) * jax.lax.rsqrt(v + EPS) * p["g1"] + p["beta1"]
    h = jnp.maximum(h, 0.0)
    h2 = jnp.dot(h.astype(matmul_dtype), w2,
                 preferred_element_type=jnp.float32) + p["b2"]
    m2 = h2.mean(0, keepdims=True)
    v2 = ((h2 - m2) ** 2).mean(0, keepdims=True)
    h2 = (h2 - m2) * jax.lax.rsqrt(v2 + EPS) * p["g2"] + p["beta2"]
    h2 = jnp.maximum(h2, 0.0)
    return x + h2


if __name__ == "__main__":
    B, dim = 8, 32
    key = jax.random.PRNGKey(0)
    kx, kp = jax.random.split(key)
    x = jax.random.normal(kx, (B, dim), jnp.float32)
    params = init_params(kp, dim)

    out = jax.block_until_ready(resnet_block(x, params))
    assert out.shape == (B, dim)

    # Matched-precision reference (same bf16 matmul operands, f32 BN math,
    # biases kept -> also checks the exact bias-cancellation claim).
    ref_bf16 = resnet_block_ref(x, params, matmul_dtype=jnp.bfloat16)
    assert jnp.allclose(out, ref_bf16, atol=3e-3, rtol=3e-3), \
        "mismatch vs matched-precision reference"

    # Loose sanity check against the full-f32 reference (bf16 matmul drift only).
    ref_f32 = resnet_block_ref(x, params, matmul_dtype=jnp.float32)
    assert float(jnp.max(jnp.abs(out - ref_f32))) < 0.25, \
        "mismatch vs f32 reference (sanity)"

    print("KERNEL_OK")
</pallas_src>

<mosaic_0001>
module attributes {stable_mosaic.version = 11 : i64} {
  func.func @_resnet_block_kernel(%arg0: i32, %arg1: memref<8x32xf32, #tpu.memory_space<vmem>>, %arg2: memref<32x64xbf16, #tpu.memory_space<vmem>>, %arg3: memref<2x64xf32, #tpu.memory_space<vmem>>, %arg4: memref<64x32xbf16, #tpu.memory_space<vmem>>, %arg5: memref<2x32xf32, #tpu.memory_space<vmem>>, %arg6: memref<8x32xf32, #tpu.memory_space<vmem>>, %arg7: memref<8x32xbf16, #tpu.memory_space<vmem>>) attributes {dimension_semantics = [#tpu.dimension_semantics<arbitrary>], iteration_bounds = array<i64: 1>, scalar_prefetch = 0 : i64, scratch_operands = 1 : i64, tpu.core_type = #tpu.core_type<tc>, window_params = [{pipeline_mode = #tpu.pipeline_mode<synchronous>, transform_indices = @transform_0, window_bounds = array<i64: 8, 32>}, {transform_indices = @transform_1, window_bounds = array<i64: 32, 64>}, {transform_indices = @transform_2, window_bounds = array<i64: 2, 64>}, {transform_indices = @transform_3, window_bounds = array<i64: 64, 32>}, {pipeline_mode = #tpu.pipeline_mode<synchronous>, transform_indices = @transform_4, window_bounds = array<i64: 2, 32>}, {pipeline_mode = #tpu.pipeline_mode<synchronous>, transform_indices = @transform_5, window_bounds = array<i64: 8, 32>}]} {
    %c0_i32 = arith.constant 0 : i32
    %0 = arith.cmpi eq, %arg0, %c0_i32 : i32
    %1 = arith.extui %0 : i1 to i32
    %c0_i32_0 = arith.constant 0 : i32
    %2 = arith.cmpi ne, %1, %c0_i32_0 : i32
    scf.if %2 {
      %c0_22 = arith.constant 0 : index
      %c0_23 = arith.constant 0 : index
      %47 = vector.load %arg1[%c0_22, %c0_23] : memref<8x32xf32, #tpu.memory_space<vmem>>, vector<8x32xf32>
      %48 = arith.truncf %47 : vector<8x32xf32> to vector<8x32xbf16>
      %c0_24 = arith.constant 0 : index
      %c0_25 = arith.constant 0 : index
      %49 = vector.load %arg7[%c0_24, %c0_25] : memref<8x32xbf16, #tpu.memory_space<vmem>>, vector<8x32xbf16>
      tpu.vector_store %arg7[%c0_24, %c0_25], %48 {strides = array<i32>} : memref<8x32xbf16, #tpu.memory_space<vmem>>, vector<8x32xbf16>,
    } else {
    }
    %c0 = arith.constant 0 : index
    %c0_1 = arith.constant 0 : index
    %3 = vector.load %arg7[%c0, %c0_1] : memref<8x32xbf16, #tpu.memory_space<vmem>>, vector<8x32xbf16>
    %c0_2 = arith.constant 0 : index
    %c0_3 = arith.constant 0 : index
    %4 = vector.load %arg2[%c0_2, %c0_3] : memref<32x64xbf16, #tpu.memory_space<vmem>>, vector<32x64xbf16>
    %cst = arith.constant dense<0.000000e+00> : vector<8x64xf32>
    %5 = tpu.matmul %3, %4, %cst {dimension_numbers = #tpu.dot_dimension_numbers<[1], [0], [0], [1], [0, 0, 1, 1], [], []>} : vector<8x32xbf16>, vector<32x64xbf16>, vector<8x64xf32> -> vector<8x64xf32>
    %c0_4 = arith.constant 0 : index
    %c0_5 = arith.constant 0 : index
    %6 = vector.load %arg3[%c0_4, %c0_5] : memref<2x64xf32, #tpu.memory_space<vmem>>, vector<2x64xf32>
    %cst_6 = arith.constant dense<0.000000e+00> : vector<64xf32>
    %7 = vector.multi_reduction <add>, %5, %cst_6 [0] : vector<8x64xf32> to vector<64xf32>
    %8 = vector.shape_cast %7 : vector<64xf32> to vector<1x64xf32>
    %cst_7 = arith.constant 1.250000e-01 : f32
    %9 = vector.broadcast %cst_7 : f32 to vector<1x64xf32>
    %10 = arith.mulf %8, %9 : vector<1x64xf32>
    %11 = arith.mulf %5, %5 : vector<8x64xf32>
    %cst_8 = arith.constant dense<0.000000e+00> : vector<64xf32>
    %12 = vector.multi_reduction <add>, %11, %cst_8 [0] : vector<8x64xf32> to vector<64xf32>
    %13 = vector.shape_cast %12 : vector<64xf32> to vector<1x64xf32>
    %cst_9 = arith.constant 1.250000e-01 : f32
    %14 = vector.broadcast %cst_9 : f32 to vector<1x64xf32>
    %15 = arith.mulf %13, %14 : vector<1x64xf32>
    %16 = arith.mulf %10, %10 : vector<1x64xf32>
    %17 = arith.subf %15, %16 : vector<1x64xf32>
    %cst_10 = arith.constant 0.000000e+00 : f32
    %18 = vector.broadcast %cst_10 : f32 to vector<1x64xf32>
    %19 = arith.maximumf %17, %18 : vector<1x64xf32>
    %20 = vector.broadcast %10 : vector<1x64xf32> to vector<8x64xf32>
    %21 = arith.subf %5, %20 : vector<8x64xf32>
    %cst_11 = arith.constant 9.99999974E-6 : f32
    %22 = vector.broadcast %cst_11 : f32 to vector<1x64xf32>
    %23 = arith.addf %19, %22 : vector<1x64xf32>
    %24 = math.rsqrt %23 : vector<1x64xf32>
    %25 = vector.broadcast %24 : vector<1x64xf32> to vector<8x64xf32>
    %26 = arith.mulf %21, %25 : vector<8x64xf32>
    %27 = vector.extract_strided_slice %6 {offsets = [0, 0], sizes = [1, 64], strides = [1, 1]} : vector<2x64xf32> to vector<1x64xf32>
    %28 = vector.broadcast %27 : vector<1x64xf32> to vector<8x64xf32>
    %29 = arith.mulf %26, %28 : vector<8x64xf32>
    %30 = vector.extract_strided_slice %6 {offsets = [1, 0], sizes = [1, 64], strides = [1, 1]} : vector<2x64xf32> to vector<1x64xf32>
    %31 = vector.broadcast %30 : vector<1x64xf32> to vector<8x64xf32>
    %32 = arith.addf %29, %31 : vector<8x64xf32>
    %cst_12 = arith.constant 0.000000e+00 : f32
    %33 = vector.broadcast %cst_12 : f32 to vector<8x64xf32>
    %34 = arith.maximumf %32, %33 : vector<8x64xf32>
    %35 = arith.truncf %34 : vector<8x64xf32> to vector<8x64xbf16>
    %c0_13 = arith.constant 0 : index
    %c0_14 = arith.constant 0 : index
    %36 = vector.load %arg4[%c0_13, %c0_14] : memref<64x32xbf16, #tpu.memory_space<vmem>>, vector<64x32xbf16>
    %cst_15 = arith.constant dense<0.000000e+00> : vector<8x32xf32>
    %37 = tpu.matmul %35, %36, %cst_15 {dimension_numbers = #tpu.dot_dimension_numbers<[1], [0], [0], [1], [0, 0, 1, 1], [], []>} : vector<8x64xbf16>, vector<64x32xbf16>, vector<8x32xf32> -> vector<8x32xf32>
    %c0_i32_16 = arith.constant 0 : i32
    %38 = arith.cmpi eq, %arg0, %c0_i32_16 : i32
    %39 = arith.extui %38 : i1 to i32
    %c0_i32_17 = arith.constant 0 : i32
    %40 = arith.cmpi ne, %39, %c0_i32_17 : i32
    scf.if %40 {
      %c0_22 = arith.constant 0 : index
      %c0_23 = arith.constant 0 : index
      %47 = vector.load %arg6[%c0_22, %c0_23] : memref<8x32xf32, #tpu.memory_space<vmem>>, vector<8x32xf32>
      tpu.vector_store %arg6[%c0_22, %c0_23], %37 {strides = array<i32>} : memref<8x32xf32, #tpu.memory_space<vmem>>, vector<8x32xf32>,
    } else {
    }
    %c0_i32_18 = arith.constant 0 : i32
    %41 = arith.cmpi sgt, %arg0, %c0_i32_18 : i32
    %42 = arith.extui %41 : i1 to i32
    %c0_i32_19 = arith.constant 0 : i32
    %43 = arith.cmpi ne, %42, %c0_i32_19 : i32
    scf.if %43 {
      %c0_22 = arith.constant 0 : index
      %c0_23 = arith.constant 0 : index
      %47 = vector.load %arg6[%c0_22, %c0_23] : memref<8x32xf32, #tpu.memory_space<vmem>>, vector<8x32xf32>
      %48 = arith.addf %47, %37 : vector<8x32xf32>
      %c0_24 = arith.constant 0 : index
      %c0_25 = arith.constant 0 : index
      %49 = vector.load %arg6[%c0_24, %c0_25] : memref<8x32xf32, #tpu.memory_space<vmem>>, vector<8x32xf32>
      tpu.vector_store %arg6[%c0_24, %c0_25], %48 {strides = array<i32>} : memref<8x32xf32, #tpu.memory_space<vmem>>, vector<8x32xf32>,
    } else {
    }
    %c0_i32_20 = arith.constant 0 : i32
    %44 = arith.cmpi eq, %arg0, %c0_i32_20 : i32
    %45 = arith.extui %44 : i1 to i32
    %c0_i32_21 = arith.constant 0 : i32
    %46 = arith.cmpi ne, %45, %c0_i32_21 : i32
    scf.if %46 {
      %c0_22 = arith.constant 0 : index
      %c0_23 = arith.constant 0 : index
      %47 = vector.load %arg5[%c0_22, %c0_23] : memref<2x32xf32, #tpu.memory_space<vmem>>, vector<2x32xf32>
      %c0_24 = arith.constant 0 : index
      %c0_25 = arith.constant 0 : index
      %48 = vector.load %arg6[%c0_24, %c0_25] : memref<8x32xf32, #tpu.memory_space<vmem>>, vector<8x32xf32>
      %cst_26 = arith.constant dense<0.000000e+00> : vector<32xf32>
      %49 = vector.multi_reduction <add>, %48, %cst_26 [0] : vector<8x32xf32> to vector<32xf32>
      %50 = vector.shape_cast %49 : vector<32xf32> to vector<1x32xf32>
      %cst_27 = arith.constant 1.250000e-01 : f32
      %51 = vector.broadcast %cst_27 : f32 to vector<1x32xf32>
      %52 = arith.mulf %50, %51 : vector<1x32xf32>
      %53 = vector.broadcast %52 : vector<1x32xf32> to vector<8x32xf32>
      %54 = arith.subf %48, %53 : vector<8x32xf32>
      %55 = arith.mulf %54, %54 : vector<8x32xf32>
      %cst_28 = arith.constant dense<0.000000e+00> : vector<32xf32>
      %56 = vector.multi_reduction <add>, %55, %cst_28 [0] : vector<8x32xf32> to vector<32xf32>
      %57 = vector.shape_cast %56 : vector<32xf32> to vector<1x32xf32>
      %cst_29 = arith.constant 1.250000e-01 : f32
      %58 = vector.broadcast %cst_29 : f32 to vector<1x32xf32>
      %59 = arith.mulf %57, %58 : vector<1x32xf32>
      %cst_30 = arith.constant 9.99999974E-6 : f32
      %60 = vector.broadcast %cst_30 : f32 to vector<1x32xf32>
      %61 = arith.addf %59, %60 : vector<1x32xf32>
      %62 = math.rsqrt %61 : vector<1x32xf32>
      %63 = vector.broadcast %62 : vector<1x32xf32> to vector<8x32xf32>
      %64 = arith.mulf %54, %63 : vector<8x32xf32>
      %65 = vector.extract_strided_slice %47 {offsets = [0, 0], sizes = [1, 32], strides = [1, 1]} : vector<2x32xf32> to vector<1x32xf32>
      %66 = vector.broadcast %65 : vector<1x32xf32> to vector<8x32xf32>
      %67 = arith.mulf %64, %66 : vector<8x32xf32>
      %68 = vector.extract_strided_slice %47 {offsets = [1, 0], sizes = [1, 32], strides = [1, 1]} : vector<2x32xf32> to vector<1x32xf32>
      %69 = vector.broadcast %68 : vector<1x32xf32> to vector<8x32xf32>
      %70 = arith.addf %67, %69 : vector<8x32xf32>
      %cst_31 = arith.constant 0.000000e+00 : f32
      %71 = vector.broadcast %cst_31 : f32 to vector<8x32xf32>
      %72 = arith.maximumf %70, %71 : vector<8x32xf32>
      %c0_32 = arith.constant 0 : index
      %c0_33 = arith.constant 0 : index
      %73 = vector.load %arg1[%c0_32, %c0_33] : memref<8x32xf32, #tpu.memory_space<vmem>>, vector<8x32xf32>
      %74 = arith.addf %73, %72 : vector<8x32xf32>
      %c0_34 = arith.constant 0 : index
      %c0_35 = arith.constant 0 : index
      %75 = vector.load %arg6[%c0_34, %c0_35] : memref<8x32xf32, #tpu.memory_space<vmem>>, vector<8x32xf32>
      tpu.vector_store %arg6[%c0_34, %c0_35], %74 {strides = array<i32>} : memref<8x32xf32, #tpu.memory_space<vmem>>, vector<8x32xf32>,
    } else {
    }
    return
  }
  func.func @transform_0(%arg0: i32) -> (i32, i32) {
    %c0_i32 = arith.constant 0 : i32
    %c0_i32_0 = arith.constant 0 : i32
    %c0_i32_1 = arith.constant 0 : i32
    return %c0_i32, %c0_i32_0 : i32, i32
  }
  func.func @transform_1(%arg0: i32) -> (i32, i32) {
    %c0_i32 = arith.constant 0 : i32
    %c0_i32_0 = arith.constant 0 : i32
    return %c0_i32, %arg0 : i32, i32
  }
  func.func @transform_2(%arg0: i32) -> (i32, i32) {
    %c0_i32 = arith.constant 0 : i32
    %c0_i32_0 = arith.constant 0 : i32
    return %c0_i32, %arg0 : i32, i32
  }
  func.func @transform_3(%arg0: i32) -> (i32, i32) {
    %c0_i32 = arith.constant 0 : i32
    %c0_i32_0 = arith.constant 0 : i32
    return %arg0, %c0_i32 : i32, i32
  }
  func.func @transform_4(%arg0: i32) -> (i32, i32) {
    %c0_i32 = arith.constant 0 : i32
    %c0_i32_0 = arith.constant 0 : i32
    %c0_i32_1 = arith.constant 0 : i32
    return %c0_i32, %c0_i32_0 : i32, i32
  }
  func.func @transform_5(%arg0: i32) -> (i32, i32) {
    %c0_i32 = arith.constant 0 : i32
    %c0_i32_0 = arith.constant 0 : i32
    %c0_i32_1 = arith.constant 0 : i32
    return %c0_i32, %c0_i32_0 : i32, i32
  }
}

</mosaic_0001>

<llo_original>
// kernel: tpu_custom_call.1
$region0: #{tpu_custom_call.1}
  #allocation0 [shape = 'u32[]', space=smem, size = 0x4, offset = 0x4, fixed_abs, tag = 'smem constant byte address 0x4 - core index']
  #allocation1 [shape = 'u32[72,128]{1,0:T(1,128)}', space=vmem, size = 0x9000, scoped, tag = 'internal scratch']
  #allocation2 [shape = 'bf16[8,32]{1,0:T(8,128)(2,1)}', space=vmem, size = 0x800, scoped, tag = 'scratch operand']
  %s0 = inlined_call_operand.vmem [shape: f32[8,32], index: 0, kind: input, shape index: {}]
  %s1 = inlined_call_operand.vmem [shape: bf16[32,64], index: 1, kind: input, shape index: {}]
  %s2 = inlined_call_operand.vmem [shape: f32[2,64], index: 2, kind: input, shape index: {}]
  %s3 = inlined_call_operand.vmem [shape: bf16[64,32], index: 3, kind: input, shape index: {}]
  %s4 = inlined_call_operand.vmem [shape: f32[2,32], index: 4, kind: input, shape index: {}]
  %s5 = inlined_call_operand.hbm [shape: f32[8,32], index: 5, kind: output, shape index: {}]
  %s6 = sld [smem:[#allocation0]]
  $region46: #{tpu_custom_call.1} parent=0
    _
  %s8 = ssub.s32 1, %s6
  %s9 = scalar_select 0, %s8, %s6
  $region1: #{tpu_custom_call.1} parent=0
    #allocation3 [shape = 'u8[4096]{0}', space=vmem, size = 0x1000, scoped, tag = 'output window, operand 0, single buffered']
    #allocation4 [shape = 's32[1]{0}', space=sflag, size = 0x4, scoped, tag = 'scoped memory for tpu_custom_call.1']
    %10 = vsyncpa [#allocation4], 0
    // Predicated region
    $region2: #{tpu_custom_call.1} parent=1 // pred_check
      _
    $region3: #{tpu_custom_call.1} parent=1 // pred_check_branch
      %12 = sbr.rel (0) target = $region5
    $region4: #{tpu_custom_call.1} parent=1 // pred_region
      _
    $region5: #{tpu_custom_call.1} parent=1 // pred_fallthru
      _
    // Predicated region
    $region6: #{tpu_custom_call.1} parent=1 // pred_check
      _
    $region7: #{tpu_custom_call.1} parent=1 // pred_check_branch
      %14 = sbr.rel (0) target = $region9
    $region8: #{tpu_custom_call.1} parent=1 // pred_region
      _
    $region9: #{tpu_custom_call.1} parent=1 // pred_fallthru
      _
    // Predicated region
    $region10: #{tpu_custom_call.1} parent=1 // pred_check
      _
    $region11: #{tpu_custom_call.1} parent=1 // pred_check_branch
      %16 = sbr.rel (0) target = $region13
    $region12: #{tpu_custom_call.1} parent=1 // pred_region
      _
    $region13: #{tpu_custom_call.1} parent=1 // pred_fallthru
      _
    // Predicated region
    $region14: #{tpu_custom_call.1} parent=1 // pred_check
      _
    $region15: #{tpu_custom_call.1} parent=1 // pred_check_branch
      %18 = sbr.rel (0) target = $region17
    $region16: #{tpu_custom_call.1} parent=1 // pred_region
      _
    $region17: #{tpu_custom_call.1} parent=1 // pred_fallthru
      _
    // Predicated region
    $region18: #{tpu_custom_call.1} parent=1 // pred_check
      _
    $region19: #{tpu_custom_call.1} parent=1 // pred_check_branch
      %20 = sbr.rel (0) target = $region21
    $region20: #{tpu_custom_call.1} parent=1 // pred_region
      _
    $region21: #{tpu_custom_call.1} parent=1 // pred_fallthru
      _
    %p22 = scmp.eq.s32.totalorder 0, 0
    // Predicated region
    $region22: #{tpu_custom_call.1} parent=1 // pred_check
      %p23 = pneg %p22
    $region23: #{tpu_custom_call.1} parent=1 // pred_check_branch
      %25 = sbr.rel (%p23) target = $region25
    $region24: #{tpu_custom_call.1} parent=1 // pred_region
      %v26 = vld [vmem:[%s0] sm:$0xff]
      %v27 = vpack.c.bf16 %v26, %v26
      %vm28 = vcmask 257024
      %29 = vst.msk [vmem:[#allocation2] sm:$0xf] %vm28, %v27
    $region25: #{tpu_custom_call.1} parent=1 // pred_fallthru
      _
    %v30 = vld [vmem:[#allocation2] sm:$0xf]
    %v31 = vld [vmem:[%s1] sm:$0xf]
    %v32 = vld [vmem:[%s1 + $0x4] sm:$0xf]
    %v33 = vld [vmem:[%s1 + $0x8] sm:$0xf]
    %v34 = vld [vmem:[%s1 + $0xc] sm:$0xf]
    %v39 = vunpack.c.l.b16 %v31
    %v40 = vunpack.c.l.b16 %v32
    %v41 = vunpack.c.l.b16 %v33
    %v42 = vunpack.c.l.b16 %v34
    %v43 = vpack.c.b16 %v40, %v39
    %v44 = vpack.c.b16 %v42, %v41
    %vm47 = vcmask 261120
    %v49 = vsel %vm47, %v30, 0
    %51 = vmatpush.bf16.msra.mxu0 0
    %52 = vmatpush.bf16.msra.mxu0 0
    %53 = vmatpush.bf16.msra.mxu0 0
    %54 = vmatpush.bf16.msra.mxu0 0
    %55 = vmatpush.bf16.msra.mxu0 0
    %56 = vmatpush.bf16.msra.mxu0 0
    %57 = vmatpush.bf16.msra.mxu0 %v44
    %58 = vmatpush.bf16.msra.mxu0 %v43
    %59 = vmatmul.bf16.gmra.mxu0 %v49
    %v60 = vpop.f32.mrf.mxu0
    %v61 = vadd.f32 0.0, %v60
    %v62 = vpop.f32.mrf.mxu0
    %63 = vdwg.mxu0
    %v64 = vld [vmem:[%s2] sm:$0x3]
    %vm65 = vcmask 523264
    %v66 = vsel %vm65, %v61, 0.0
    %v67 = vrot.slane %v66, 4
    %v68 = vadd.f32 %v66, %v67
    %v69 = vrot.slane %v68, 2
    %v70 = vadd.f32 %v68, %v69
    %v71 = vrot.slane %v70, 1
    %v72 = vadd.f32 %v70, %v71
    %v73 = vmul.f32 %v72, 0.125
    %v74 = vmul.f32 %v61, %v61
    %v75 = vsel %vm65, %v74, 0.0
    %v76 = vrot.slane %v75, 4
    %v77 = vadd.f32 %v75, %v76
    %v78 = vrot.slane %v77, 2
    %v79 = vadd.f32 %v77, %v78
    %v80 = vrot.slane %v79, 1
    %v81 = vadd.f32 %v79, %v80
    %v82 = vmul.f32 %v81, 0.125
    %v83 = vmul.f32 %v73, %v73
    %v84 = vsub.f32 %v82, %v83
    %v85 = vmax.f32 %v84, 0.0
    %v86 = vsub.f32 %v61, %v73
    %v87 = vadd.f32 %v85, 1e-05
    %v88 = vrsqrt.pop %v87
    %v89 = vmul.f32 %v88, %v87
    %v90 = vmul.f32 %v89, %v88
    %v91 = vmul.f32 0.5, %v90
    %v92 = vsub.f32 1.5, %v91
    %v93 = vmul.f32 %v88, %v92
    %vm94 = vweird.f32 %v87
    %vm95 = vweird.f32 %v88
    %vm96 = vmor %vm94, %vm95
    %v97 = vsel %vm96, %v88, %v93
    %v98 = vmul.f32 %v86, %v97
    %v99 = vperm.slane %v64, 0
    %v100 = vmul.f32 %v98, %v99
    %v101 = vperm.slane %v64, 1
    %v102 = vadd.f32 %v100, %v101
    %v103 = vmax.f32 %v102, 0.0
    %v104 = vpack.c.bf16 %v103, %v103
    %v105 = vld [vmem:[%s3] sm:$0xf]
    %v106 = vld [vmem:[%s3 + $0x4] sm:$0xf]
    %v107 = vld [vmem:[%s3 + $0x8] sm:$0xf]
    %v108 = vld [vmem:[%s3 + $0xc] sm:$0xf]
    %v109 = vld [vmem:[%s3 + $0x10] sm:$0xf]
    %v110 = vld [vmem:[%s3 + $0x14] sm:$0xf]
    %v111 = vld [vmem:[%s3 + $0x18] sm:$0xf]
    %v112 = vld [vmem:[%s3 + $0x1c] sm:$0xf]
    %v121 = vunpack.c.l.b16 %v105
    %v122 = vunpack.c.l.b16 %v106
    %v123 = vunpack.c.l.b16 %v107
    %v124 = vunpack.c.l.b16 %v108
    %v125 = vunpack.c.l.b16 %v109
    %v126 = vunpack.c.l.b16 %v110
    %v127 = vunpack.c.l.b16 %v111
    %v128 = vunpack.c.l.b16 %v112
    %v129 = vpack.c.b16 %v122, %v121
    %v130 = vpack.c.b16 %v124, %v123
    %v131 = vpack.c.b16 %v126, %v125
    %v132 = vpack.c.b16 %v128, %v127
    %v138 = vsel %vm65, %v104, 0
    %140 = vmatpush.bf16.msra.mxu0 0
    %141 = vmatpush.bf16.msra.mxu0 0
    %142 = vmatpush.bf16.msra.mxu0 0
    %143 = vmatpush.bf16.msra.mxu0 0
    %144 = vmatpush.bf16.msra.mxu0 %v132
    %145 = vmatpush.bf16.msra.mxu0 %v131
    %146 = vmatpush.bf16.msra.mxu0 %v130
    %147 = vmatpush.bf16.msra.mxu0 %v129
    %148 = vmatmul.bf16.gmra.mxu0 %v138
    %v149 = vpop.f32.mrf.mxu0
    %v150 = vadd.f32 0.0, %v149
    %v151 = vpop.f32.mrf.mxu0
    %152 = vdwg.mxu0
    // Predicated region
    $region26: #{tpu_custom_call.1} parent=1 // pred_check
      %p153 = pneg %p22
    $region27: #{tpu_custom_call.1} parent=1 // pred_check_branch
      %155 = sbr.rel (%p153) target = $region29
    $region28: #{tpu_custom_call.1} parent=1 // pred_region
      %156 = vst.msk [vmem:[#allocation3] sm:$0xff] %vm47, %v150
    $region29: #{tpu_custom_call.1} parent=1 // pred_fallthru
      _
    %p157 = scmp.gt.s32.totalorder 0, 0
    // Predicated region
    $region30: #{tpu_custom_call.1} parent=1 // pred_check
      %p158 = pneg %p157
    $region31: #{tpu_custom_call.1} parent=1 // pred_check_branch
      %160 = sbr.rel (%p158) target = $region33
    $region32: #{tpu_custom_call.1} parent=1 // pred_region
      %v161 = vld [vmem:[#allocation3] sm:$0xff]
      %v162 = vadd.f32 %v161, %v150
      %163 = vst.msk [vmem:[#allocation3] sm:$0xff] %vm47, %v162
    $region33: #{tpu_custom_call.1} parent=1 // pred_fallthru
      _
    // Predicated region
    $region34: #{tpu_custom_call.1} parent=1 // pred_check
      %p164 = pneg %p22
    $region35: #{tpu_custom_call.1} parent=1 // pred_check_branch
      %166 = sbr.rel (%p164) target = $region37
    $region36: #{tpu_custom_call.1} parent=1 // pred_region
      %v167 = vld [vmem:[%s4] sm:$0x3]
      %v168 = vld [vmem:[#allocation3] sm:$0xff]
      %v169 = vsel %vm47, %v168, 0.0
      %v170 = vrot.slane %v169, 4
      %v171 = vadd.f32 %v169, %v170
      %v172 = vrot.slane %v171, 2
      %v173 = vadd.f32 %v171, %v172
      %v174 = vrot.slane %v173, 1
      %v175 = vadd.f32 %v173, %v174
      %v176 = vmul.f32 %v175, 0.125
      %v177 = vsub.f32 %v168, %v176
      %v178 = vmul.f32 %v177, %v177
      %v179 = vsel %vm47, %v178, 0.0
      %v180 = vrot.slane %v179, 4
      %v181 = vadd.f32 %v179, %v180
      %v182 = vrot.slane %v181, 2
      %v183 = vadd.f32 %v181, %v182
      %v184 = vrot.slane %v183, 1
      %v185 = vadd.f32 %v183, %v184
      %v186 = vmul.f32 %v185, 0.125
      %v187 = vadd.f32 %v186, 1e-05
      %v188 = vrsqrt.pop %v187
      %v189 = vmul.f32 %v188, %v187
      %v190 = vmul.f32 %v189, %v188
      %v191 = vmul.f32 0.5, %v190
      %v192 = vsub.f32 1.5, %v191
      %v193 = vmul.f32 %v188, %v192
      %vm194 = vweird.f32 %v187
      %vm195 = vweird.f32 %v188
      %vm196 = vmor %vm194, %vm195
      %v197 = vsel %vm196, %v188, %v193
      %v198 = vmul.f32 %v177, %v197
      %v199 = vperm.slane %v167, 0
      %v200 = vmul.f32 %v198, %v199
      %v201 = vperm.slane %v167, 1
      %v202 = vadd.f32 %v200, %v201
      %v203 = vmax.f32 %v202, 0.0
      %v204 = vld [vmem:[%s0] sm:$0xff]
      %v205 = vadd.f32 %v204, %v203
      %206 = vst.msk [vmem:[#allocation3] sm:$0xff] %vm47, %v205
    $region37: #{tpu_custom_call.1} parent=1 // pred_fallthru
      _
    // Predicated region
    $region38: #{tpu_custom_call.1} parent=1 // pred_check
      _
    $region39: #{tpu_custom_call.1} parent=1 // pred_check_branch
      %208 = sbr.rel (0) target = $region41
    $region40: #{tpu_custom_call.1} parent=1 // pred_region
      %210 = vsyncadd [#allocation4], 0
      %s212 = sshll.u32 [#allocation3], 4
      %s213 = int_to_ptr.vmem [resolvable:$true] %s212
      %s214 = sshll.u32 %s5, 4
      %s215 = int_to_ptr.hbm [resolvable:$true] %s214
      %217 = dma.vmem_to_hbm [thread:$0]  %s213, 128, %s215, [#allocation4]
    $region41: #{tpu_custom_call.1} parent=1 // pred_fallthru
      _
    // Predicated region
    $region42: #{tpu_custom_call.1} parent=1 // pred_check
      _
    $region43: #{tpu_custom_call.1} parent=1 // pred_check_branch
      %219 = sbr.rel (0) target = $region45
    $region44: #{tpu_custom_call.1} parent=1 // pred_region
      %221 = dma.done [#allocation4], 128
    $region45: #{tpu_custom_call.1} parent=1 // pred_fallthru
      _
    %222 = vsyncpa [#allocation4], 1

</llo_original>
